<compile_context>
chip_gen: v6e
topology: v6e:2x2x1
jax: 0.10.0
libtpu: 0.0.40
codegen_flags: <defaults>
</compile_context>

<pallas_src>
import jax
import jax.numpy as jnp
from jax import lax
from jax.experimental import pallas as pl
from jax.experimental.pallas import tpu as pltpu

# configs['raw_feature_len'] — number of Gaussian kernels (bins), fixed in-script.
N_BINS = 11


def kernal_mus(n_kernels):
    l_mu = [1.0]
    if n_kernels == 1:
        return l_mu
    bin_size = 2.0 / (n_kernels - 1)
    l_mu.append(1.0 - bin_size / 2.0)
    for i in range(1, n_kernels - 1):
        l_mu.append(l_mu[i] - bin_size)
    return l_mu


def kernel_sigmas(n_kernels):
    l_sigma = [0.001]
    if n_kernels == 1:
        return l_sigma
    l_sigma += [0.1] * (n_kernels - 1)
    return l_sigma


# Static Gaussian-bin constants, folded at trace time:
#   exp(-(s - mu)^2 / sigma^2 / 2) == exp((s - mu)^2 * COEF),  COEF = -0.5 / sigma^2
_MU = tuple(float(m) for m in kernal_mus(N_BINS))
_COEF = tuple(-0.5 / float(s) ** 2 for s in kernel_sigmas(N_BINS))


def _round_up(x, m):
    return ((x + m - 1) // m) * m


def matching_model(paper_embedding, per_embedding, *, max_tile_q=512, max_tile_p=256):
    """KNRM Gaussian-kernel matching; returns a [N_BINS] vector identical in
    semantics to matchingModel.forward(paper_embedding, per_embedding)."""
    Q, D = paper_embedding.shape
    P, _ = per_embedding.shape

    # ---- tiling: lane-dense paper (Q) tiles, P blocked for the parallel axis ----
    if Q <= max_tile_q:
        tile_q, q_pad = Q, Q                      # single grid step, no padding
    else:
        n_qt_tmp = -(-Q // max_tile_q)            # balance tiles to minimize padding
        tile_q = _round_up(-(-Q // n_qt_tmp), 8)
        q_pad = tile_q * n_qt_tmp
    if P <= max_tile_p:
        tile_p, p_pad = P, P
    else:
        n_pb_tmp = -(-P // max_tile_p)
        tile_p = _round_up(-(-P // n_pb_tmp), 8)
        p_pad = tile_p * n_pb_tmp

    if q_pad != Q:
        paper_embedding = jnp.pad(paper_embedding, ((0, q_pad - Q), (0, 0)))
    if p_pad != P:
        per_embedding = jnp.pad(per_embedding, ((0, p_pad - P), (0, 0)))

    n_pb = p_pad // tile_p
    n_qt = q_pad // tile_q

    def kernel(paper_ref, per_ref, out_ref, per_n_ref, acc_ref):
        q = pl.program_id(1)

        # per-embedding normalization depends only on the P-block: compute it once
        # per block (q == 0) into VMEM scratch and reuse across all Q tiles.
        @pl.when(q == 0)
        def _init():
            per = per_ref[...].astype(jnp.float32)
            inv = lax.rsqrt(jnp.maximum(jnp.sum(per * per, axis=1, keepdims=True),
                                        1e-24))
            per_n_ref[...] = per * inv            # == x / max(||x||, 1e-12)
            acc_ref[...] = jnp.zeros_like(acc_ref)

        # F.normalize(p=2, dim=1) for this paper tile (rsqrt: one EUP op + mul).
        paper = paper_ref[...].astype(jnp.float32)
        inv_p = lax.rsqrt(jnp.maximum(jnp.sum(paper * paper, axis=1, keepdims=True),
                                      1e-24))
        paper_n = paper * inv_p

        # sim = per_n @ paper_n.T -> [tile_p, tile_q] on the MXU.
        sim = lax.dot_general(per_n_ref[...], paper_n, (((1,), (1,)), ((), ())),
                              preferred_element_type=jnp.float32)

        if q_pad != Q:
            # Padded paper columns: push sim far away so every bin's Gaussian
            # underflows to exactly 0 (one select, instead of per-bin masks).
            col = lax.broadcasted_iota(jnp.int32, (1, tile_q), 1) + q * tile_q
            sim = jnp.where(col < Q, sim, jnp.float32(1e4))

        # Static unrolled loop over the N_BINS Gaussian kernels on full 2-D
        # [tile_p, tile_q] tiles; 11 independent exp chains for the scheduler.
        per_bin = []
        for b in range(N_BINS):
            d = sim - _MU[b]
            per_bin.append(jnp.sum(jnp.exp(d * d * _COEF[b]), axis=-1, keepdims=True))
        acc_ref[...] += jnp.concatenate(per_bin, axis=-1)      # [tile_p, N_BINS]

        @pl.when(q == pl.num_programs(1) - 1)
        def _finalize():
            lp = jnp.log(jnp.maximum(acc_ref[...], 1e-10)) * 0.01   # [tile_p, NB]
            if p_pad != P:
                row = (lax.broadcasted_iota(jnp.int32, (tile_p, 1), 0)
                       + pl.program_id(0) * tile_p)
                lp = jnp.where(row < P, lp, 0.0)    # drop padded person rows
            out_ref[...] = jnp.sum(lp, axis=0, keepdims=True)[None]  # [1, 1, NB]

    cost = pl.CostEstimate(
        flops=2 * p_pad * q_pad * D + 6 * p_pad * q_pad * N_BINS,
        transcendentals=p_pad * q_pad * N_BINS,
        bytes_accessed=4 * (q_pad * D + p_pad * D + n_pb * N_BINS),
    )

    out = pl.pallas_call(
        kernel,
        out_shape=jax.ShapeDtypeStruct((n_pb, 1, N_BINS), jnp.float32),
        grid_spec=pltpu.PrefetchScalarGridSpec(
            num_scalar_prefetch=0,
            grid=(n_pb, n_qt),                      # P-blocks parallel, Q reduction
            in_specs=[
                pl.BlockSpec((tile_q, D), lambda p, q: (q, 0)),   # paper tile
                pl.BlockSpec((tile_p, D), lambda p, q: (p, 0)),   # person block
            ],
            out_specs=pl.BlockSpec((1, 1, N_BINS), lambda p, q: (p, 0, 0)),
            scratch_shapes=[
                pltpu.VMEM((tile_p, D), jnp.float32),        # cached normalized per
                pltpu.VMEM((tile_p, N_BINS), jnp.float32),   # pooling_sum accumulator
            ],
        ),
        compiler_params=pltpu.CompilerParams(
            dimension_semantics=("parallel", "arbitrary"),
            vmem_limit_bytes=32 * 1024 * 1024,
        ),
        cost_estimate=cost,
    )(paper_embedding, per_embedding)

    # Sum per-P-block partial results -> [N_BINS] (same shape as the torch output).
    return jnp.sum(out[:, 0, :], axis=0)


def matching_ref(paper_embedding, per_embedding):
    """Pure-JAX reference mirroring the PyTorch forward exactly."""
    mu = jnp.asarray(kernal_mus(N_BINS), jnp.float32).reshape(1, 1, N_BINS)
    sigma = jnp.asarray(kernel_sigmas(N_BINS), jnp.float32).reshape(1, 1, N_BINS)
    pn = paper_embedding / jnp.maximum(
        jnp.linalg.norm(paper_embedding, axis=1, keepdims=True), 1e-12)
    qn = per_embedding / jnp.maximum(
        jnp.linalg.norm(per_embedding, axis=1, keepdims=True), 1e-12)
    sim = (qn @ pn.T)[:, :, None]
    pv = jnp.exp(-(sim - mu) ** 2 / sigma ** 2 / 2.0)
    ps = jnp.sum(pv, axis=1)
    lp = jnp.log(jnp.maximum(ps, 1e-10)) * 0.01
    return jnp.sum(lp, axis=0)


if __name__ == "__main__":
    key = jax.random.PRNGKey(0)
    k1, k2 = jax.random.split(key)
    Q, P, D = 16, 8, 32   # paper tokens, person tokens, embedding dim
    paper = jax.random.normal(k1, (Q, D), dtype=jnp.float32)
    per = jax.random.normal(k2, (P, D), dtype=jnp.float32)

    out = jax.block_until_ready(matching_model(paper, per))
    ref = matching_ref(paper, per)

    assert out.shape == (N_BINS,)
    assert jnp.allclose(out, ref, atol=2e-5, rtol=2e-5), (out, ref)
    print("KERNEL_OK")
</pallas_src>

<mosaic_0001>
module attributes {stable_mosaic.version = 11 : i64} {
  func.func @kernel(%arg0: i32, %arg1: i32, %arg2: memref<16x32xf32, #tpu.memory_space<vmem>>, %arg3: memref<8x32xf32, #tpu.memory_space<vmem>>, %arg4: memref<1x1x11xf32, #tpu.memory_space<vmem>>, %arg5: memref<8x32xf32, #tpu.memory_space<vmem>>, %arg6: memref<8x11xf32, #tpu.memory_space<vmem>>) attributes {dimension_semantics = [#tpu.dimension_semantics<parallel>, #tpu.dimension_semantics<arbitrary>], iteration_bounds = array<i64: 1, 1>, scalar_prefetch = 0 : i64, scratch_operands = 2 : i64, tpu.core_type = #tpu.core_type<tc>, window_params = [{transform_indices = @transform_0, window_bounds = array<i64: 16, 32>}, {transform_indices = @transform_1, window_bounds = array<i64: 8, 32>}, {transform_indices = @transform_2, window_bounds = array<i64: 1, 1, 11>}]} {
    %c0_i32 = arith.constant 0 : i32
    %0 = arith.cmpi eq, %arg1, %c0_i32 : i32
    %1 = arith.extui %0 : i1 to i32
    %c0_i32_0 = arith.constant 0 : i32
    %2 = arith.cmpi ne, %1, %c0_i32_0 : i32
    scf.if %2 {
      %c0_45 = arith.constant 0 : index
      %c0_46 = arith.constant 0 : index
      %109 = vector.load %arg3[%c0_45, %c0_46] : memref<8x32xf32, #tpu.memory_space<vmem>>, vector<8x32xf32>
      %110 = arith.mulf %109, %109 : vector<8x32xf32>
      %cst_47 = arith.constant dense<0.000000e+00> : vector<8xf32>
      %111 = vector.multi_reduction <add>, %110, %cst_47 [1] : vector<8x32xf32> to vector<8xf32>
      %112 = vector.shape_cast %111 : vector<8xf32> to vector<8x1xf32>
      %cst_48 = arith.constant 1.000000e-24 : f32
      %113 = vector.broadcast %cst_48 : f32 to vector<8x1xf32>
      %114 = arith.maximumf %112, %113 : vector<8x1xf32>
      %115 = math.rsqrt %114 : vector<8x1xf32>
      %116 = vector.broadcast %115 : vector<8x1xf32> to vector<8x32xf32>
      %117 = arith.mulf %109, %116 : vector<8x32xf32>
      %c0_49 = arith.constant 0 : index
      %c0_50 = arith.constant 0 : index
      %118 = vector.load %arg5[%c0_49, %c0_50] : memref<8x32xf32, #tpu.memory_space<vmem>>, vector<8x32xf32>
      tpu.vector_store %arg5[%c0_49, %c0_50], %117 {strides = array<i32>} : memref<8x32xf32, #tpu.memory_space<vmem>>, vector<8x32xf32>,
      %cst_51 = arith.constant 0.000000e+00 : f32
      %119 = vector.broadcast %cst_51 : f32 to vector<8x11xf32>
      %c0_52 = arith.constant 0 : index
      %c0_53 = arith.constant 0 : index
      %120 = vector.load %arg6[%c0_52, %c0_53] : memref<8x11xf32, #tpu.memory_space<vmem>>, vector<8x11xf32>
      tpu.vector_store %arg6[%c0_52, %c0_53], %119 {strides = array<i32>} : memref<8x11xf32, #tpu.memory_space<vmem>>, vector<8x11xf32>,
    } else {
    }
    %c0 = arith.constant 0 : index
    %c0_1 = arith.constant 0 : index
    %3 = vector.load %arg2[%c0, %c0_1] : memref<16x32xf32, #tpu.memory_space<vmem>>, vector<16x32xf32>
    %4 = arith.mulf %3, %3 : vector<16x32xf32>
    %cst = arith.constant dense<0.000000e+00> : vector<16xf32>
    %5 = vector.multi_reduction <add>, %4, %cst [1] : vector<16x32xf32> to vector<16xf32>
    %6 = vector.shape_cast %5 : vector<16xf32> to vector<16x1xf32>
    %cst_2 = arith.constant 1.000000e-24 : f32
    %7 = vector.broadcast %cst_2 : f32 to vector<16x1xf32>
    %8 = arith.maximumf %6, %7 : vector<16x1xf32>
    %9 = math.rsqrt %8 : vector<16x1xf32>
    %10 = vector.broadcast %9 : vector<16x1xf32> to vector<16x32xf32>
    %11 = arith.mulf %3, %10 : vector<16x32xf32>
    %c0_3 = arith.constant 0 : index
    %c0_4 = arith.constant 0 : index
    %12 = vector.load %arg5[%c0_3, %c0_4] : memref<8x32xf32, #tpu.memory_space<vmem>>, vector<8x32xf32>
    %cst_5 = arith.constant dense<0.000000e+00> : vector<8x16xf32>
    %13 = tpu.matmul %12, %11, %cst_5 {dimension_numbers = #tpu.dot_dimension_numbers<[1], [1], [0], [0], [0, 0, 1, 0], [], []>} : vector<8x32xf32>, vector<16x32xf32>, vector<8x16xf32> -> vector<8x16xf32>
    %cst_6 = arith.constant 1.000000e+00 : f32
    %14 = vector.broadcast %cst_6 : f32 to vector<8x16xf32>
    %15 = arith.subf %13, %14 : vector<8x16xf32>
    %16 = arith.mulf %15, %15 : vector<8x16xf32>
    %cst_7 = arith.constant -5.000000e+05 : f32
    %17 = vector.broadcast %cst_7 : f32 to vector<8x16xf32>
    %18 = arith.mulf %16, %17 : vector<8x16xf32>
    %19 = math.exp %18 : vector<8x16xf32>
    %cst_8 = arith.constant dense<0.000000e+00> : vector<8xf32>
    %20 = vector.multi_reduction <add>, %19, %cst_8 [1] : vector<8x16xf32> to vector<8xf32>
    %21 = vector.shape_cast %20 : vector<8xf32> to vector<8x1xf32>
    %cst_9 = arith.constant 0.899999976 : f32
    %22 = vector.broadcast %cst_9 : f32 to vector<8x16xf32>
    %23 = arith.subf %13, %22 : vector<8x16xf32>
    %24 = arith.mulf %23, %23 : vector<8x16xf32>
    %cst_10 = arith.constant -5.000000e+01 : f32
    %25 = vector.broadcast %cst_10 : f32 to vector<8x16xf32>
    %26 = arith.mulf %24, %25 : vector<8x16xf32>
    %27 = math.exp %26 : vector<8x16xf32>
    %cst_11 = arith.constant dense<0.000000e+00> : vector<8xf32>
    %28 = vector.multi_reduction <add>, %27, %cst_11 [1] : vector<8x16xf32> to vector<8xf32>
    %29 = vector.shape_cast %28 : vector<8xf32> to vector<8x1xf32>
    %cst_12 = arith.constant 0.699999988 : f32
    %30 = vector.broadcast %cst_12 : f32 to vector<8x16xf32>
    %31 = arith.subf %13, %30 : vector<8x16xf32>
    %32 = arith.mulf %31, %31 : vector<8x16xf32>
    %cst_13 = arith.constant -5.000000e+01 : f32
    %33 = vector.broadcast %cst_13 : f32 to vector<8x16xf32>
    %34 = arith.mulf %32, %33 : vector<8x16xf32>
    %35 = math.exp %34 : vector<8x16xf32>
    %cst_14 = arith.constant dense<0.000000e+00> : vector<8xf32>
    %36 = vector.multi_reduction <add>, %35, %cst_14 [1] : vector<8x16xf32> to vector<8xf32>
    %37 = vector.shape_cast %36 : vector<8xf32> to vector<8x1xf32>
    %cst_15 = arith.constant 5.000000e-01 : f32
    %38 = vector.broadcast %cst_15 : f32 to vector<8x16xf32>
    %39 = arith.subf %13, %38 : vector<8x16xf32>
    %40 = arith.mulf %39, %39 : vector<8x16xf32>
    %cst_16 = arith.constant -5.000000e+01 : f32
    %41 = vector.broadcast %cst_16 : f32 to vector<8x16xf32>
    %42 = arith.mulf %40, %41 : vector<8x16xf32>
    %43 = math.exp %42 : vector<8x16xf32>
    %cst_17 = arith.constant dense<0.000000e+00> : vector<8xf32>
    %44 = vector.multi_reduction <add>, %43, %cst_17 [1] : vector<8x16xf32> to vector<8xf32>
    %45 = vector.shape_cast %44 : vector<8xf32> to vector<8x1xf32>
    %cst_18 = arith.constant 3.000000e-01 : f32
    %46 = vector.broadcast %cst_18 : f32 to vector<8x16xf32>
    %47 = arith.subf %13, %46 : vector<8x16xf32>
    %48 = arith.mulf %47, %47 : vector<8x16xf32>
    %cst_19 = arith.constant -5.000000e+01 : f32
    %49 = vector.broadcast %cst_19 : f32 to vector<8x16xf32>
    %50 = arith.mulf %48, %49 : vector<8x16xf32>
    %51 = math.exp %50 : vector<8x16xf32>
    %cst_20 = arith.constant dense<0.000000e+00> : vector<8xf32>
    %52 = vector.multi_reduction <add>, %51, %cst_20 [1] : vector<8x16xf32> to vector<8xf32>
    %53 = vector.shape_cast %52 : vector<8xf32> to vector<8x1xf32>
    %cst_21 = arith.constant 1.000000e-01 : f32
    %54 = vector.broadcast %cst_21 : f32 to vector<8x16xf32>
    %55 = arith.subf %13, %54 : vector<8x16xf32>
    %56 = arith.mulf %55, %55 : vector<8x16xf32>
    %cst_22 = arith.constant -5.000000e+01 : f32
    %57 = vector.broadcast %cst_22 : f32 to vector<8x16xf32>
    %58 = arith.mulf %56, %57 : vector<8x16xf32>
    %59 = math.exp %58 : vector<8x16xf32>
    %cst_23 = arith.constant dense<0.000000e+00> : vector<8xf32>
    %60 = vector.multi_reduction <add>, %59, %cst_23 [1] : vector<8x16xf32> to vector<8xf32>
    %61 = vector.shape_cast %60 : vector<8xf32> to vector<8x1xf32>
    %cst_24 = arith.constant -1.000000e-01 : f32
    %62 = vector.broadcast %cst_24 : f32 to vector<8x16xf32>
    %63 = arith.subf %13, %62 : vector<8x16xf32>
    %64 = arith.mulf %63, %63 : vector<8x16xf32>
    %cst_25 = arith.constant -5.000000e+01 : f32
    %65 = vector.broadcast %cst_25 : f32 to vector<8x16xf32>
    %66 = arith.mulf %64, %65 : vector<8x16xf32>
    %67 = math.exp %66 : vector<8x16xf32>
    %cst_26 = arith.constant dense<0.000000e+00> : vector<8xf32>
    %68 = vector.multi_reduction <add>, %67, %cst_26 [1] : vector<8x16xf32> to vector<8xf32>
    %69 = vector.shape_cast %68 : vector<8xf32> to vector<8x1xf32>
    %cst_27 = arith.constant -3.000000e-01 : f32
    %70 = vector.broadcast %cst_27 : f32 to vector<8x16xf32>
    %71 = arith.subf %13, %70 : vector<8x16xf32>
    %72 = arith.mulf %71, %71 : vector<8x16xf32>
    %cst_28 = arith.constant -5.000000e+01 : f32
    %73 = vector.broadcast %cst_28 : f32 to vector<8x16xf32>
    %74 = arith.mulf %72, %73 : vector<8x16xf32>
    %75 = math.exp %74 : vector<8x16xf32>
    %cst_29 = arith.constant dense<0.000000e+00> : vector<8xf32>
    %76 = vector.multi_reduction <add>, %75, %cst_29 [1] : vector<8x16xf32> to vector<8xf32>
    %77 = vector.shape_cast %76 : vector<8xf32> to vector<8x1xf32>
    %cst_30 = arith.constant -5.000000e-01 : f32
    %78 = vector.broadcast %cst_30 : f32 to vector<8x16xf32>
    %79 = arith.subf %13, %78 : vector<8x16xf32>
    %80 = arith.mulf %79, %79 : vector<8x16xf32>
    %cst_31 = arith.constant -5.000000e+01 : f32
    %81 = vector.broadcast %cst_31 : f32 to vector<8x16xf32>
    %82 = arith.mulf %80, %81 : vector<8x16xf32>
    %83 = math.exp %82 : vector<8x16xf32>
    %cst_32 = arith.constant dense<0.000000e+00> : vector<8xf32>
    %84 = vector.multi_reduction <add>, %83, %cst_32 [1] : vector<8x16xf32> to vector<8xf32>
    %85 = vector.shape_cast %84 : vector<8xf32> to vector<8x1xf32>
    %cst_33 = arith.constant -0.699999988 : f32
    %86 = vector.broadcast %cst_33 : f32 to vector<8x16xf32>
    %87 = arith.subf %13, %86 : vector<8x16xf32>
    %88 = arith.mulf %87, %87 : vector<8x16xf32>
    %cst_34 = arith.constant -5.000000e+01 : f32
    %89 = vector.broadcast %cst_34 : f32 to vector<8x16xf32>
    %90 = arith.mulf %88, %89 : vector<8x16xf32>
    %91 = math.exp %90 : vector<8x16xf32>
    %cst_35 = arith.constant dense<0.000000e+00> : vector<8xf32>
    %92 = vector.multi_reduction <add>, %91, %cst_35 [1] : vector<8x16xf32> to vector<8xf32>
    %93 = vector.shape_cast %92 : vector<8xf32> to vector<8x1xf32>
    %cst_36 = arith.constant -0.899999976 : f32
    %94 = vector.broadcast %cst_36 : f32 to vector<8x16xf32>
    %95 = arith.subf %13, %94 : vector<8x16xf32>
    %96 = arith.mulf %95, %95 : vector<8x16xf32>
    %cst_37 = arith.constant -5.000000e+01 : f32
    %97 = vector.broadcast %cst_37 : f32 to vector<8x16xf32>
    %98 = arith.mulf %96, %97 : vector<8x16xf32>
    %99 = math.exp %98 : vector<8x16xf32>
    %cst_38 = arith.constant dense<0.000000e+00> : vector<8xf32>
    %100 = vector.multi_reduction <add>, %99, %cst_38 [1] : vector<8x16xf32> to vector<8xf32>
    %101 = vector.shape_cast %100 : vector<8xf32> to vector<8x1xf32>
    %c0_39 = arith.constant 0 : index
    %c0_40 = arith.constant 0 : index
    %102 = vector.load %arg6[%c0_39, %c0_40] : memref<8x11xf32, #tpu.memory_space<vmem>>, vector<8x11xf32>
    %103 = tpu.concatenate %21, %29, %37, %45, %53, %61, %69, %77, %85, %93, %101 in 1 : vector<8x1xf32>, vector<8x1xf32>, vector<8x1xf32>, vector<8x1xf32>, vector<8x1xf32>, vector<8x1xf32>, vector<8x1xf32>, vector<8x1xf32>, vector<8x1xf32>, vector<8x1xf32>, vector<8x1xf32> -> vector<8x11xf32>
    %104 = arith.addf %102, %103 : vector<8x11xf32>
    %c0_41 = arith.constant 0 : index
    %c0_42 = arith.constant 0 : index
    %105 = vector.load %arg6[%c0_41, %c0_42] : memref<8x11xf32, #tpu.memory_space<vmem>>, vector<8x11xf32>
    tpu.vector_store %arg6[%c0_41, %c0_42], %104 {strides = array<i32>} : memref<8x11xf32, #tpu.memory_space<vmem>>, vector<8x11xf32>,
    %c0_i32_43 = arith.constant 0 : i32
    %106 = arith.cmpi eq, %arg1, %c0_i32_43 : i32
    %107 = arith.extui %106 : i1 to i32
    %c0_i32_44 = arith.constant 0 : i32
    %108 = arith.cmpi ne, %107, %c0_i32_44 : i32
    scf.if %108 {
      %c0_45 = arith.constant 0 : index
      %c0_46 = arith.constant 0 : index
      %109 = vector.load %arg6[%c0_45, %c0_46] : memref<8x11xf32, #tpu.memory_space<vmem>>, vector<8x11xf32>
      %cst_47 = arith.constant 1.000000e-10 : f32
      %110 = vector.broadcast %cst_47 : f32 to vector<8x11xf32>
      %111 = arith.maximumf %109, %110 : vector<8x11xf32>
      %112 = math.log %111 : vector<8x11xf32>
      %cst_48 = arith.constant 0.00999999977 : f32
      %113 = vector.broadcast %cst_48 : f32 to vector<8x11xf32>
      %114 = arith.mulf %112, %113 : vector<8x11xf32>
      %cst_49 = arith.constant dense<0.000000e+00> : vector<11xf32>
      %115 = vector.multi_reduction <add>, %114, %cst_49 [0] : vector<8x11xf32> to vector<11xf32>
      %116 = vector.shape_cast %115 : vector<11xf32> to vector<1x11xf32>
      %117 = vector.shape_cast %116 : vector<1x11xf32> to vector<1x1x11xf32>
      %c0_50 = arith.constant 0 : index
      %c0_51 = arith.constant 0 : index
      %c0_52 = arith.constant 0 : index
      %118 = vector.load %arg4[%c0_50, %c0_51, %c0_52] : memref<1x1x11xf32, #tpu.memory_space<vmem>>, vector<1x1x11xf32>
      tpu.vector_store %arg4[%c0_50, %c0_51, %c0_52], %117 {strides = array<i32>} : memref<1x1x11xf32, #tpu.memory_space<vmem>>, vector<1x1x11xf32>,
    } else {
    }
    return
  }
  func.func @transform_0(%arg0: i32, %arg1: i32) -> (i32, i32) {
    %c0_i32 = arith.constant 0 : i32
    %c0_i32_0 = arith.constant 0 : i32
    return %arg1, %c0_i32 : i32, i32
  }
  func.func @transform_1(%arg0: i32, %arg1: i32) -> (i32, i32) {
    %c0_i32 = arith.constant 0 : i32
    %c0_i32_0 = arith.constant 0 : i32
    return %arg0, %c0_i32 : i32, i32
  }
  func.func @transform_2(%arg0: i32, %arg1: i32) -> (i32, i32, i32) {
    %c0_i32 = arith.constant 0 : i32
    %c0_i32_0 = arith.constant 0 : i32
    %c0_i32_1 = arith.constant 0 : i32
    return %arg0, %c0_i32, %c0_i32_0 : i32, i32, i32
  }
}

</mosaic_0001>

<llo_original>
// kernel: tpu_custom_call.1
$region0: #{tpu_custom_call.1}
  #allocation0 [shape = 'u32[]', space=smem, size = 0x4, offset = 0x4, fixed_abs, tag = 'smem constant byte address 0x4 - core index']
  #allocation1 [shape = 'u32[144,128]{1,0:T(1,128)}', space=vmem, size = 0x12000, scoped, tag = 'internal scratch']
  #allocation2 [shape = 'f32[8,32]{1,0:T(8,128)}', space=vmem, size = 0x1000, scoped, tag = 'scratch operand']
  #allocation3 [shape = 'f32[8,11]{1,0:T(8,128)}', space=vmem, size = 0x1000, scoped, tag = 'scratch operand']
  %s0 = inlined_call_operand.hbm [shape: f32[16,32], index: 0, kind: input, shape index: {}]
  %s1 = inlined_call_operand.hbm [shape: f32[8,32], index: 1, kind: input, shape index: {}]
  %s2 = inlined_call_operand.hbm [shape: f32[1,1,11], index: 2, kind: output, shape index: {}]
  %s3 = sld [smem:[#allocation0]]
  $region34: #{tpu_custom_call.1} parent=0
    _
  %s5 = ssub.s32 1, %s3
  %s6 = scalar_select 0, %s5, %s3
  $region1: #{tpu_custom_call.1} parent=0
    #allocation4 [shape = 'u8[8192]{0}', space=vmem, size = 0x2000, scoped, tag = 'input window, operand 0, single buffered']
    #allocation5 [shape = 's32[1]{0}', space=sflag, size = 0x4, scoped, tag = 'scoped memory for tpu_custom_call.1']
    #allocation6 [shape = 's32[1]{0}', space=sflag, size = 0x4, scoped, tag = 'scoped memory for tpu_custom_call.1']
    #allocation7 [shape = 'u8[4096]{0}', space=vmem, size = 0x1000, scoped, tag = 'input window, operand 1, single buffered']
    #allocation8 [shape = 's32[1]{0}', space=sflag, size = 0x4, scoped, tag = 'scoped memory for tpu_custom_call.1']
    #allocation9 [shape = 'u8[512]{0}', space=vmem, size = 0x400, scoped, tag = 'output window, operand 0, single buffered']
    %7 = vsyncpa [#allocation5], 0
    %8 = vsyncpa [#allocation8], 0
    %9 = vsyncpa [#allocation6], 0
    // Predicated region
    $region2: #{tpu_custom_call.1} parent=1 // pred_check
      _
    $region3: #{tpu_custom_call.1} parent=1 // pred_check_branch
      %11 = sbr.rel (0) target = $region5
    $region4: #{tpu_custom_call.1} parent=1 // pred_region
      %s13 = ssub.s32 256, 256
      %14 = vsyncadd [#allocation5], %s13
      %s15 = sshll.u32 [#allocation4], 4
      %s16 = int_to_ptr.vmem [resolvable:$true] %s15
      %21 = dma.hbm_to_vmem [thread:$0]  %s0, 256, %s16, [#allocation5], 128, 128, 8
    $region5: #{tpu_custom_call.1} parent=1 // pred_fallthru
      _
    // Predicated region
    $region6: #{tpu_custom_call.1} parent=1 // pred_check
      _
    $region7: #{tpu_custom_call.1} parent=1 // pred_check_branch
      %23 = sbr.rel (0) target = $region9
    $region8: #{tpu_custom_call.1} parent=1 // pred_region
      %s25 = ssub.s32 128, 128
      %26 = vsyncadd [#allocation8], %s25
      %s28 = sshll.u32 [#allocation7], 4
      %s29 = int_to_ptr.vmem [resolvable:$true] %s28
      %31 = dma.hbm_to_vmem [thread:$0]  %s1, 128, %s29, [#allocation8]
    $region9: #{tpu_custom_call.1} parent=1 // pred_fallthru
      _
    // Predicated region
    $region10: #{tpu_custom_call.1} parent=1 // pred_check
      _
    $region11: #{tpu_custom_call.1} parent=1 // pred_check_branch
      %33 = sbr.rel (0) target = $region13
    $region12: #{tpu_custom_call.1} parent=1 // pred_region
      %34 = dma.done [#allocation5], 256
    $region13: #{tpu_custom_call.1} parent=1 // pred_fallthru
      _
    // Predicated region
    $region14: #{tpu_custom_call.1} parent=1 // pred_check
      _
    $region15: #{tpu_custom_call.1} parent=1 // pred_check_branch
      %36 = sbr.rel (0) target = $region17
    $region16: #{tpu_custom_call.1} parent=1 // pred_region
      %37 = dma.done [#allocation8], 128
    $region17: #{tpu_custom_call.1} parent=1 // pred_fallthru
      _
    %p38 = scmp.eq.s32.totalorder 0, 0
    // Predicated region
    $region18: #{tpu_custom_call.1} parent=1 // pred_check
      %p39 = pneg %p38
    $region19: #{tpu_custom_call.1} parent=1 // pred_check_branch
      %41 = sbr.rel (%p39) target = $region21
    $region20: #{tpu_custom_call.1} parent=1 // pred_region
      %v42 = vld [vmem:[#allocation7] sm:$0xff]
      %v43 = vmul.f32 %v42, %v42
      %vm44 = vcmask 261120
      %v45 = vsel %vm44, %v43, 0.0
      %46 = vadd.xlane.f32.xlu0 %v45
      %v47 = vpop.xlane.xlu0 %46
      %v48 = vmax.f32 %v47, 1e-24
      %v49 = vrsqrt.pop %v48
      %v50 = vmul.f32 %v42, %v49
      %51 = vst.msk [vmem:[#allocation2] sm:$0xff] %vm44, %v50
      %vm52 = vcmask 89088
      %53 = vst.msk [vmem:[#allocation3] sm:$0xff] %vm52, 0.0
    $region21: #{tpu_custom_call.1} parent=1 // pred_fallthru
      _
    %v54 = vld [vmem:[#allocation4] sm:$0xff]
    %v55 = vld [vmem:[#allocation4 + $0x8] sm:$0xff]
    %v56 = vmul.f32 %v54, %v54
    %v57 = vmul.f32 %v55, %v55
    %vm58 = vcmask 261120
    %v59 = vsel %vm58, %v56, 0.0
    %60 = vadd.xlane.f32.xlu0 %v59
    %v61 = vpop.xlane.xlu0 %60
    %v62 = vsel %vm58, %v57, 0.0
    %63 = vadd.xlane.f32.xlu0 %v62
    %v64 = vpop.xlane.xlu0 %63
    %v65 = vmax.f32 %v61, 1e-24
    %v66 = vmax.f32 %v64, 1e-24
    %v67 = vrsqrt.pop %v65
    %v68 = vrsqrt.pop %v66
    %v69 = vmul.f32 %v54, %v67
    %v70 = vmul.f32 %v55, %v68
    %v71 = vld [vmem:[#allocation2] sm:$0xff]
    %v73 = vsel %vm58, %v71, 0
    %v76 = vsel %vm58, %v69, 0
    %v79 = vsel %vm58, %v70, 0
    %81 = vmatprep.subr.mxu0 0.0
    %82 = vmatpush1.xpose.msra.mxu0 0.0
    %83 = vmatprep.subr.mxu0 0.0
    %84 = vmatpush1.xpose.msra.mxu0 0.0
    %85 = vmatprep.subr.mxu0 0.0
    %86 = vmatpush1.xpose.msra.mxu0 0.0
    %87 = vmatprep.subr.mxu0 0.0
    %88 = vmatpush1.xpose.msra.mxu0 0.0
    %89 = vmatprep.subr.mxu0 0.0
    %90 = vmatpush1.xpose.msra.mxu0 0.0
    %91 = vmatprep.subr.mxu0 0.0
    %92 = vmatpush1.xpose.msra.mxu0 0.0
    %93 = vmatprep.subr.mxu0 0.0
    %94 = vmatpush1.xpose.msra.mxu0 0.0
    %95 = vmatprep.subr.mxu0 0.0
    %96 = vmatpush1.xpose.msra.mxu0 0.0
    %97 = vmatprep.subr.mxu0 0.0
    %98 = vmatpush1.xpose.msra.mxu0 0.0
    %99 = vmatprep.subr.mxu0 0.0
    %100 = vmatpush1.xpose.msra.mxu0 0.0
    %101 = vmatprep.subr.mxu0 0.0
    %102 = vmatpush1.xpose.msra.mxu0 0.0
    %103 = vmatprep.subr.mxu0 0.0
    %104 = vmatpush1.xpose.msra.mxu0 0.0
    %105 = vmatprep.subr.mxu0 0.0
    %106 = vmatpush1.xpose.msra.mxu0 0.0
    %107 = vmatprep.subr.mxu0 0.0
    %108 = vmatpush1.xpose.msra.mxu0 0.0
    %109 = vmatprep.subr.mxu0 0.0
    %110 = vmatpush1.xpose.msra.mxu0 %v79
    %111 = vmatprep.subr.mxu0 0.0
    %112 = vmatpush1.xpose.msra.mxu0 %v76
    %113 = vmatprep.subr.mxu0 0.0
    %114 = vmatpush2.xpose.msra.mxu0 0.0
    %115 = vmatprep.subr.mxu0 0.0
    %116 = vmatpush2.xpose.msra.mxu0 0.0
    %117 = vmatprep.subr.mxu0 0.0
    %118 = vmatpush2.xpose.msra.mxu0 0.0
    %119 = vmatprep.subr.mxu0 0.0
    %120 = vmatpush2.xpose.msra.mxu0 0.0
    %121 = vmatprep.subr.mxu0 0.0
    %122 = vmatpush2.xpose.msra.mxu0 0.0
    %123 = vmatprep.subr.mxu0 0.0
    %124 = vmatpush2.xpose.msra.mxu0 0.0
    %125 = vmatprep.subr.mxu0 0.0
    %126 = vmatpush2.xpose.msra.mxu0 0.0
    %127 = vmatprep.subr.mxu0 0.0
    %128 = vmatpush2.xpose.msra.mxu0 0.0
    %129 = vmatprep.subr.mxu0 0.0
    %130 = vmatpush2.xpose.msra.mxu0 0.0
    %131 = vmatprep.subr.mxu0 0.0
    %132 = vmatpush2.xpose.msra.mxu0 0.0
    %133 = vmatprep.subr.mxu0 0.0
    %134 = vmatpush2.xpose.msra.mxu0 0.0
    %135 = vmatprep.subr.mxu0 0.0
    %136 = vmatpush2.xpose.msra.mxu0 0.0
    %137 = vmatprep.subr.mxu0 0.0
    %138 = vmatpush2.xpose.msra.mxu0 0.0
    %139 = vmatprep.subr.mxu0 0.0
    %140 = vmatpush2.xpose.msra.mxu0 0.0
    %141 = vmatprep.subr.mxu0 0.0
    %142 = vmatpush2.xpose.msra.mxu0 0.0
    %143 = vmatprep.subr.mxu0 0.0
    %144 = vmatpush2.xpose.msra.mxu0 0.0
    %145 = vmatprep.mubr.f32.mxu0 0.0
    %146 = vmatmul.mubr.f32.gmra.mxu0 %v73
    %v147 = vpop.f32.mrf.mxu0
    %v148 = vadd.f32 0.0, %v147
    %v149 = vpop.f32.mrf.mxu0
    %150 = vdwg.mxu0
    %v151 = vsub.f32 %v148, 1.0
    %v152 = vmul.f32 %v151, %v151
    %v153 = vmul.f32 %v152, -500000.0
    %v154 = vmul.f32 %v153, 1.442695
    %v155 = vpow.pop %v154
    %vm156 = vcmask 130048
    %v157 = vsel %vm156, %v155, 0.0
    %158 = vadd.xlane.f32.xlu0 %v157
    %v159 = vpop.xlane.xlu0 %158
    %v160 = vsub.f32 %v148, 0.9
    %v161 = vmul.f32 %v160, %v160
    %v162 = vmul.f32 %v161, -50.0
    %v163 = vmul.f32 %v162, 1.442695
    %v164 = vpow.pop %v163
    %v165 = vsel %vm156, %v164, 0.0
    %166 = vadd.xlane.f32.xlu0 %v165
    %v167 = vpop.xlane.xlu0 %166
    %v168 = vsub.f32 %v148, 0.7
    %v169 = vmul.f32 %v168, %v168
    %v170 = vmul.f32 %v169, -50.0
    %v171 = vmul.f32 %v170, 1.442695
    %v172 = vpow.pop %v171
    %v173 = vsel %vm156, %v172, 0.0
    %174 = vadd.xlane.f32.xlu0 %v173
    %v175 = vpop.xlane.xlu0 %174
    %v176 = vsub.f32 %v148, 0.5
    %v177 = vmul.f32 %v176, %v176
    %v178 = vmul.f32 %v177, -50.0
    %v179 = vmul.f32 %v178, 1.442695
    %v180 = vpow.pop %v179
    %v181 = vsel %vm156, %v180, 0.0
    %182 = vadd.xlane.f32.xlu0 %v181
    %v183 = vpop.xlane.xlu0 %182
    %v184 = vsub.f32 %v148, 0.3
    %v185 = vmul.f32 %v184, %v184
    %v186 = vmul.f32 %v185, -50.0
    %v187 = vmul.f32 %v186, 1.442695
    %v188 = vpow.pop %v187
    %v189 = vsel %vm156, %v188, 0.0
    %190 = vadd.xlane.f32.xlu0 %v189
    %v191 = vpop.xlane.xlu0 %190
    %v192 = vsub.f32 %v148, 0.1
    %v193 = vmul.f32 %v192, %v192
    %v194 = vmul.f32 %v193, -50.0
    %v195 = vmul.f32 %v194, 1.442695
    %v196 = vpow.pop %v195
    %v197 = vsel %vm156, %v196, 0.0
    %198 = vadd.xlane.f32.xlu0 %v197
    %v199 = vpop.xlane.xlu0 %198
    %v200 = vsub.f32 %v148, -0.1
    %v201 = vmul.f32 %v200, %v200
    %v202 = vmul.f32 %v201, -50.0
    %v203 = vmul.f32 %v202, 1.442695
    %v204 = vpow.pop %v203
    %v205 = vsel %vm156, %v204, 0.0
    %206 = vadd.xlane.f32.xlu0 %v205
    %v207 = vpop.xlane.xlu0 %206
    %v208 = vsub.f32 %v148, -0.3
    %v209 = vmul.f32 %v208, %v208
    %v210 = vmul.f32 %v209, -50.0
    %v211 = vmul.f32 %v210, 1.442695
    %v212 = vpow.pop %v211
    %v213 = vsel %vm156, %v212, 0.0
    %214 = vadd.xlane.f32.xlu0 %v213
    %v215 = vpop.xlane.xlu0 %214
    %v216 = vsub.f32 %v148, -0.5
    %v217 = vmul.f32 %v216, %v216
    %v218 = vmul.f32 %v217, -50.0
    %v219 = vmul.f32 %v218, 1.442695
    %v220 = vpow.pop %v219
    %v221 = vsel %vm156, %v220, 0.0
    %222 = vadd.xlane.f32.xlu0 %v221
    %v223 = vpop.xlane.xlu0 %222
    %v224 = vsub.f32 %v148, -0.7
    %v225 = vmul.f32 %v224, %v224
    %v226 = vmul.f32 %v225, -50.0
    %v227 = vmul.f32 %v226, 1.442695
    %v228 = vpow.pop %v227
    %v229 = vsel %vm156, %v228, 0.0
    %230 = vadd.xlane.f32.xlu0 %v229
    %v231 = vpop.xlane.xlu0 %230
    %v232 = vsub.f32 %v148, -0.9
    %v233 = vmul.f32 %v232, %v232
    %v234 = vmul.f32 %v233, -50.0
    %v235 = vmul.f32 %v234, 1.442695
    %v236 = vpow.pop %v235
    %v237 = vsel %vm156, %v236, 0.0
    %238 = vadd.xlane.f32.xlu0 %v237
    %v239 = vpop.xlane.xlu0 %238
    %v240 = vld [vmem:[#allocation3] sm:$0xff]
    %vm241 = vcmask 7168
    %v242 = vsel %vm241, %v159, %v167
    %vm243 = vcmask 15360
    %v244 = vsel %vm243, %v242, %v175
    %vm245 = vcmask 23552
    %v246 = vsel %vm245, %v244, %v183
    %vm247 = vcmask 31744
    %v248 = vsel %vm247, %v246, %v191
    %vm249 = vcmask 39936
    %v250 = vsel %vm249, %v248, %v199
    %vm251 = vcmask 48128
    %v252 = vsel %vm251, %v250, %v207
    %vm253 = vcmask 56320
    %v254 = vsel %vm253, %v252, %v215
    %vm255 = vcmask 64512
    %v256 = vsel %vm255, %v254, %v223
    %vm257 = vcmask 72704
    %v258 = vsel %vm257, %v256, %v231
    %vm259 = vcmask 80896
    %v260 = vsel %vm259, %v258, %v239
    %v261 = vadd.f32 %v240, %v260
    %vm262 = vcmask 89088
    %263 = vst.msk [vmem:[#allocation3] sm:$0xff] %vm262, %v261
    // Predicated region
    $region22: #{tpu_custom_call.1} parent=1 // pred_check
      %p264 = pneg %p38
    $region23: #{tpu_custom_call.1} parent=1 // pred_check_branch
      %266 = sbr.rel (%p264) target = $region25
    $region24: #{tpu_custom_call.1} parent=1 // pred_region
      %v267 = vld [vmem:[#allocation3] sm:$0xff]
      %v268 = vmax.f32 %v267, 1e-10
      %v269 = vlog2.pop %v268
      %v270 = vmul.f32 %v269, 0.6931472
      %v271 = vmul.f32 %v270, 0.01
      %v272 = vsel %vm262, %v271, 0.0
      %v273 = vrot.slane %v272, 4
      %v274 = vadd.f32 %v272, %v273
      %v275 = vrot.slane %v274, 2
      %v276 = vadd.f32 %v274, %v275
      %v277 = vrot.slane %v276, 1
      %v278 = vadd.f32 %v276, %v277
      %vm279 = vcmask 81920
      %280 = vst.msk [vmem:[#allocation9] sm:$0x1] %vm279, %v278
    $region25: #{tpu_custom_call.1} parent=1 // pred_fallthru
      _
    // Predicated region
    $region26: #{tpu_custom_call.1} parent=1 // pred_check
      _
    $region27: #{tpu_custom_call.1} parent=1 // pred_check_branch
      %282 = sbr.rel (0) target = $region29
    $region28: #{tpu_custom_call.1} parent=1 // pred_region
      %s284 = ssub.s32 16, 16
      %285 = vsyncadd [#allocation6], %s284
      %s287 = sshll.u32 [#allocation9], 4
      %s288 = int_to_ptr.vmem [resolvable:$true] %s287
      %290 = dma.vmem_to_hbm [thread:$0]  %s288, 16, %s2, [#allocation6]
    $region29: #{tpu_custom_call.1} parent=1 // pred_fallthru
      _
    // Predicated region
    $region30: #{tpu_custom_call.1} parent=1 // pred_check
      _
    $region31: #{tpu_custom_call.1} parent=1 // pred_check_branch
      %292 = sbr.rel (0) target = $region33
    $region32: #{tpu_custom_call.1} parent=1 // pred_region
      %293 = dma.done [#allocation6], 16
    $region33: #{tpu_custom_call.1} parent=1 // pred_fallthru
      _
    %294 = vsyncpa [#allocation5], 1
    %295 = vsyncpa [#allocation8], 1
    %296 = vsyncpa [#allocation6], 1

</llo_original>
